<compile_context>
chip_gen: v6e
topology: v6e:2x2x1
jax: 0.10.0
libtpu: 0.0.40
codegen_flags: <defaults>
</compile_context>

<pallas_src>
import jax
import jax.numpy as jnp
from jax.experimental import pallas as pl
from jax.experimental.pallas import tpu as pltpu


def ar_kernel(x_ref, w_ref, b_ref, o_ref):
    # x_ref: (BT, W*F) VMEM input block (lane-dense)
    # w_ref: (1, W*F)  VMEM repeated weights (f32)
    # b_ref: (1, 1)    SMEM bias (scalar)
    # o_ref: (BT, F)   VMEM output block
    feat = o_ref.shape[1]
    flat = x_ref.shape[1]
    window = flat // feat

    # Weighted taps in f32 (input dtype is promoted by the f32 weight multiply).
    y = x_ref[...] * w_ref[...]                      # (BT, W*F), f32

    # Group-sum the W taps into every F-lane group via XLU rotations.
    # After the multiply, index w*F + f holds weight[w] * x[b, w, f]; summing all
    # cyclic shifts by multiples of F leaves the full sum replicated, so the result
    # does not depend on the rotation direction.
    if (window & (window - 1)) == 0:
        # power-of-two window: log2(W) fold steps (operand stays fully replicated)
        span = window
        while span > 1:
            half = span // 2
            y = y + pltpu.roll(y, shift=half * feat, axis=1)
            span = half
    else:
        # general window: accumulate all W cyclic shifts (W-1 rolls)
        acc = y
        for w in range(1, window):
            acc = acc + pltpu.roll(y, shift=w * feat, axis=1)
        y = acc

    o_ref[...] = (y[:, :feat] + b_ref[0, 0]).astype(o_ref.dtype)


def _round_up(v, m):
    return ((v + m - 1) // m) * m


_SUBLANE_PACK = {4: 8, 2: 16, 1: 32}   # f32 / bf16 / int8 sublane packing


def _vmem_budget_bytes():
    """Double-buffered tile budget, scaled to the generation's per-core VMEM."""
    try:
        cap = int(pltpu.get_tpu_info().vmem_capacity_bytes)
    except Exception:
        cap = 64 << 20          # v7x per-core VMEM (smallest of v5e/v6e/v7x)
    return min(24 << 20, max(8 << 20, (cap * 3) // 8))


def _pick_bt(B, flat, feat, itemsize, budget):
    """Batch-tile size from *padded* VMEM tile sizes (lanes -> 128, sublane pack,
    2 pipeline buffers per BlockSpec), capped so large problems keep >= 8 grid steps."""
    pack = _SUBLANE_PACK.get(itemsize, 8)
    lanes_in = _round_up(flat, 128)
    lanes_out = _round_up(feat, 128)
    per_row = 2 * (lanes_in + lanes_out) * itemsize      # dbl-buffered in + out blocks
    fixed = 2 * 8 * lanes_in * 4                         # repeated f32 weight vector
    bt = max(pack, ((budget - fixed) // per_row) // pack * pack)
    # Large problems: keep >= 8 grid steps so input prefetch overlaps output
    # writeback and both v7x TensorCores get >= 4 blocks each.
    if B * lanes_in * itemsize > (4 << 20):
        bt = min(bt, max(pack, _round_up(pl.cdiv(B, 8), pack)))
    if bt >= B:
        return B                # single (or final) full-batch block: full-dim => legal
    return bt


def ar_forward(x, weight, bias, bt=None):
    """x: (B, W, F); weight: (1, W); bias: (1,). Returns (B, 1, F)."""
    B, W, F = x.shape
    L = W * F
    itemsize = jnp.dtype(x.dtype).itemsize
    budget = _vmem_budget_bytes()
    if bt is None:
        bt = _pick_bt(B, L, F, itemsize, budget)

    x_flat = x.reshape(B, L)                                     # free, contiguous
    w_rep = jnp.repeat(weight.reshape(W).astype(jnp.float32), F).reshape(1, L)
    b_smem = bias.reshape(1, 1).astype(jnp.float32)

    vmem_limit = int(budget + (8 << 20))                         # usage + headroom

    out2d = pl.pallas_call(
        ar_kernel,
        out_shape=jax.ShapeDtypeStruct((B, F), x.dtype),
        grid_spec=pltpu.PrefetchScalarGridSpec(
            num_scalar_prefetch=0,
            grid=(pl.cdiv(B, bt),),
            in_specs=[
                pl.BlockSpec((bt, L), lambda b: (b, 0)),
                pl.BlockSpec((1, L), lambda b: (0, 0)),
                pl.BlockSpec((1, 1), lambda b: (0, 0),
                             memory_space=pltpu.MemorySpace.SMEM),
            ],
            out_specs=pl.BlockSpec((bt, F), lambda b: (b, 0)),
        ),
        compiler_params=pltpu.CompilerParams(
            dimension_semantics=("parallel",),
            vmem_limit_bytes=vmem_limit),
        cost_estimate=pl.CostEstimate(
            flops=2 * B * W * F,
            transcendentals=0,
            bytes_accessed=B * L * itemsize + B * F * itemsize + L * 4 + 4),
    )(x_flat, w_rep, b_smem)

    return out2d.reshape(B, 1, F)


if __name__ == "__main__":
    key = jax.random.PRNGKey(0)
    B, WINDOW, FEATS = 2, 8, 16

    kx, kw, kb = jax.random.split(key, 3)
    x = jax.random.normal(kx, (B, WINDOW, FEATS), dtype=jnp.float32)
    # nn.Linear(window, 1): weight (1, window), bias (1,)
    weight = jax.random.normal(kw, (1, WINDOW), dtype=jnp.float32) * 0.1
    bias = jax.random.normal(kb, (1,), dtype=jnp.float32) * 0.1

    out = ar_forward(x, weight, bias)
    jax.block_until_ready(out)

    # pure-JAX reference of the PyTorch forward
    xt = jnp.transpose(x, (0, 2, 1))                    # (B, F, W)
    ref = xt @ weight.T + bias                          # (B, F, 1)
    ref = jnp.transpose(ref, (0, 2, 1))                 # (B, 1, F)

    assert out.shape == (B, 1, FEATS)
    assert jnp.allclose(out, ref, atol=1e-5, rtol=1e-5)
    print("KERNEL_OK")
</pallas_src>

<mosaic_0001>
module attributes {stable_mosaic.version = 11 : i64} {
  func.func @ar_kernel(%arg0: i32, %arg1: memref<2x128xf32, #tpu.memory_space<vmem>>, %arg2: memref<1x128xf32, #tpu.memory_space<vmem>>, %arg3: memref<1x1xf32, #tpu.memory_space<smem>>, %arg4: memref<2x16xf32, #tpu.memory_space<vmem>>) attributes {dimension_semantics = [#tpu.dimension_semantics<parallel>], iteration_bounds = array<i64: 1>, scalar_prefetch = 0 : i64, scratch_operands = 0 : i64, tpu.core_type = #tpu.core_type<tc>, window_params = [{transform_indices = @transform_0, window_bounds = array<i64: 2, 128>}, {pipeline_mode = #tpu.pipeline_mode<synchronous>, transform_indices = @transform_1, window_bounds = array<i64: 1, 128>}, {transform_indices = @transform_2, window_bounds = array<i64: 1, 1>}, {transform_indices = @transform_3, window_bounds = array<i64: 2, 16>}]} {
    %c0 = arith.constant 0 : index
    %c0_0 = arith.constant 0 : index
    %0 = vector.load %arg1[%c0, %c0_0] : memref<2x128xf32, #tpu.memory_space<vmem>>, vector<2x128xf32>
    %c0_1 = arith.constant 0 : index
    %c0_2 = arith.constant 0 : index
    %1 = vector.load %arg2[%c0_1, %c0_2] : memref<1x128xf32, #tpu.memory_space<vmem>>, vector<1x128xf32>
    %2 = vector.broadcast %1 : vector<1x128xf32> to vector<2x128xf32>
    %3 = arith.mulf %0, %2 : vector<2x128xf32>
    %c64_i32 = arith.constant 64 : i32
    %4 = tpu.dynamic_rotate %3 by %c64_i32 dim 1 : vector<2x128xf32>, i32 -> vector<2x128xf32>
    %5 = arith.addf %3, %4 : vector<2x128xf32>
    %c32_i32 = arith.constant 32 : i32
    %6 = tpu.dynamic_rotate %5 by %c32_i32 dim 1 : vector<2x128xf32>, i32 -> vector<2x128xf32>
    %7 = arith.addf %5, %6 : vector<2x128xf32>
    %c16_i32 = arith.constant 16 : i32
    %8 = tpu.dynamic_rotate %7 by %c16_i32 dim 1 : vector<2x128xf32>, i32 -> vector<2x128xf32>
    %9 = arith.addf %7, %8 : vector<2x128xf32>
    %10 = vector.extract_strided_slice %9 {offsets = [0, 0], sizes = [2, 16], strides = [1, 1]} : vector<2x128xf32> to vector<2x16xf32>
    %c0_3 = arith.constant 0 : index
    %c0_4 = arith.constant 0 : index
    %11 = memref.load %arg3[%c0_3, %c0_4] : memref<1x1xf32, #tpu.memory_space<smem>>
    %12 = vector.broadcast %11 : f32 to vector<2x16xf32>
    %13 = arith.addf %10, %12 : vector<2x16xf32>
    %c0_5 = arith.constant 0 : index
    %c0_6 = arith.constant 0 : index
    %14 = vector.load %arg4[%c0_5, %c0_6] : memref<2x16xf32, #tpu.memory_space<vmem>>, vector<2x16xf32>
    tpu.vector_store %arg4[%c0_5, %c0_6], %13 {strides = array<i32>} : memref<2x16xf32, #tpu.memory_space<vmem>>, vector<2x16xf32>,
    return
  }
  func.func @transform_0(%arg0: i32) -> (i32, i32) {
    %c0_i32 = arith.constant 0 : i32
    %c0_i32_0 = arith.constant 0 : i32
    return %arg0, %c0_i32 : i32, i32
  }
  func.func @transform_1(%arg0: i32) -> (i32, i32) {
    %c0_i32 = arith.constant 0 : i32
    %c0_i32_0 = arith.constant 0 : i32
    %c0_i32_1 = arith.constant 0 : i32
    return %c0_i32, %c0_i32_0 : i32, i32
  }
  func.func @transform_2(%arg0: i32) -> (i32, i32) {
    %c0_i32 = arith.constant 0 : i32
    %c0_i32_0 = arith.constant 0 : i32
    %c0_i32_1 = arith.constant 0 : i32
    return %c0_i32, %c0_i32_0 : i32, i32
  }
  func.func @transform_3(%arg0: i32) -> (i32, i32) {
    %c0_i32 = arith.constant 0 : i32
    %c0_i32_0 = arith.constant 0 : i32
    return %arg0, %c0_i32 : i32, i32
  }
}

</mosaic_0001>

<llo_original>
// kernel: tpu_custom_call.1
$region0: #{tpu_custom_call.1}
  #allocation0 [shape = 'u32[]', space=smem, size = 0x4, offset = 0x4, fixed_abs, tag = 'smem constant byte address 0x4 - core index']
  #allocation1 [shape = 'u32[144,128]{1,0:T(1,128)}', space=vmem, size = 0x12000, scoped, tag = 'internal scratch']
  #allocation2 [shape = 'f32[1,1]{1,0:T(1,128)S(6)}', space=smem, size = 0x200, scoped, tag = 'scoped memory for tpu_custom_call.1']
  %s0 = inlined_call_operand.vmem [shape: f32[2,128], index: 0, kind: input, shape index: {}]
  %s1 = inlined_call_operand.vmem [shape: f32[1,128], index: 1, kind: input, shape index: {}]
  %s2 = inlined_call_operand.<no memory space> [shape: f32[1,1], index: 2, kind: input, shape index: {}]
  %s3 = inlined_call_operand.hbm [shape: f32[2,16], index: 3, kind: output, shape index: {}]
  %s4 = sld [smem:[#allocation0]]
  $region22: #{tpu_custom_call.1} parent=0
    _
  %s6 = ssub.s32 1, %s4
  %s7 = scalar_select 0, %s6, %s4
  %8 = sst [smem:[#allocation2]] %s2
  $region1: #{tpu_custom_call.1} parent=0
    #allocation3 [shape = 'u8[1024]{0}', space=vmem, size = 0x400, scoped, tag = 'output window, operand 0, single buffered']
    #allocation4 [shape = 's32[1]{0}', space=sflag, size = 0x4, scoped, tag = 'scoped memory for tpu_custom_call.1']
    %9 = vsyncpa [#allocation4], 0
    // Predicated region
    $region2: #{tpu_custom_call.1} parent=1 // pred_check
      _
    $region3: #{tpu_custom_call.1} parent=1 // pred_check_branch
      %11 = sbr.rel (0) target = $region5
    $region4: #{tpu_custom_call.1} parent=1 // pred_region
      _
    $region5: #{tpu_custom_call.1} parent=1 // pred_fallthru
      _
    // Predicated region
    $region6: #{tpu_custom_call.1} parent=1 // pred_check
      _
    $region7: #{tpu_custom_call.1} parent=1 // pred_check_branch
      %13 = sbr.rel (0) target = $region9
    $region8: #{tpu_custom_call.1} parent=1 // pred_region
      _
    $region9: #{tpu_custom_call.1} parent=1 // pred_fallthru
      _
    // Predicated region
    $region10: #{tpu_custom_call.1} parent=1 // pred_check
      _
    $region11: #{tpu_custom_call.1} parent=1 // pred_check_branch
      %15 = sbr.rel (0) target = $region13
    $region12: #{tpu_custom_call.1} parent=1 // pred_region
      _
    $region13: #{tpu_custom_call.1} parent=1 // pred_fallthru
      _
    %v16 = vld [vmem:[%s0] sm:$0x3]
    %v17 = vld [vmem:[%s1] sm:$0x1]
    %v19 = vlaneseq
    %v20 = vshrl.u32 %v19, 7
    %v21 = vsub.s32 0, %v20
    %v22 = vrot.slane %v17, %v21
    %v24 = vmul.f32 %v16, %v22
    %25 = vrot.lane.b32.xlu0 %v24, 64
    %v26 = vpop.permute.xlu0 %25
    %v27 = vadd.f32 %v24, %v26
    %28 = vrot.lane.b32.xlu0 %v27, 32
    %v29 = vpop.permute.xlu0 %28
    %v30 = vadd.f32 %v27, %v29
    %31 = vrot.lane.b32.xlu0 %v30, 16
    %v32 = vpop.permute.xlu0 %31
    %v33 = vadd.f32 %v30, %v32
    %s34 = sld [smem:[#allocation2]]
    %v35 = vstv %s34
    %v36 = vadd.f32 %v33, %v35
    %vm37 = vcmask 123904
    %38 = vst.msk [vmem:[#allocation3] sm:$0x3] %vm37, %v36
    // Predicated region
    $region14: #{tpu_custom_call.1} parent=1 // pred_check
      _
    $region15: #{tpu_custom_call.1} parent=1 // pred_check_branch
      %40 = sbr.rel (0) target = $region17
    $region16: #{tpu_custom_call.1} parent=1 // pred_region
      %s42 = ssub.s32 32, 32
      %43 = vsyncadd [#allocation4], %s42
      %s45 = sshll.u32 [#allocation3], 4
      %s46 = int_to_ptr.vmem [resolvable:$true] %s45
      %48 = dma.vmem_to_hbm [thread:$0]  %s46, 32, %s3, [#allocation4]
    $region17: #{tpu_custom_call.1} parent=1 // pred_fallthru
      _
    // Predicated region
    $region18: #{tpu_custom_call.1} parent=1 // pred_check
      _
    $region19: #{tpu_custom_call.1} parent=1 // pred_check_branch
      %50 = sbr.rel (0) target = $region21
    $region20: #{tpu_custom_call.1} parent=1 // pred_region
      %51 = dma.done [#allocation4], 32
    $region21: #{tpu_custom_call.1} parent=1 // pred_fallthru
      _
    %52 = vsyncpa [#allocation4], 1

</llo_original>
